<compile_context>
chip_gen: v6e
topology: v6e:2x2x1
jax: 0.10.0
libtpu: 0.0.40
codegen_flags: <defaults>
</compile_context>

<pallas_src>
import jax
import jax.numpy as jnp
from jax.experimental import pallas as pl
from jax.experimental.pallas import tpu as pltpu

_LANE = 128
_MIB = 1024 * 1024


def _weighted_sum_kernel(x_ref, w_ref, o_ref, acc_ref):
    # x_ref: (tc, thw); w_ref: (1, thw) or (tc, thw); o_ref/acc_ref: (tc, 1)
    k = pl.program_id(2)

    @pl.when(k == 0)
    def _():
        acc_ref[...] = jnp.zeros_like(acc_ref)

    prod = x_ref[...].astype(jnp.float32) * w_ref[...].astype(jnp.float32)
    # The lane reduction lowers to VPU adds across lane tiles plus one XLU
    # cross-lane reduce per step; the kernel is HBM-bound so XLU/VPU have
    # large slack (a deferred (tc, 128) accumulator would be negligible here).
    acc_ref[...] += jnp.sum(prod, axis=-1, keepdims=True)

    @pl.when(k == pl.num_programs(2) - 1)
    def _():
        o_ref[...] = acc_ref[...].astype(o_ref.dtype)


def _vmem_capacity_bytes():
    """Physical per-core VMEM; conservative 64 MiB (v7x-sized) fallback."""
    try:
        cap = int(pltpu.get_tpu_info().vmem_capacity_bytes)
        if cap > 0:
            return cap
    except Exception:
        pass
    return 64 * _MIB


def _largest_aligned_divisor(total, align, cap):
    """Largest divisor of `total` that is a multiple of `align` and <= cap.

    Assumes total % align == 0; falls back to `align` itself."""
    cap = min(max(align, cap), total)
    best = align
    d = align
    while d <= cap:
        if total % d == 0:
            best = d
        d += align
    return best


def _choose_tiles(N, C, HW, sub_align, max_tile_elems):
    """Pick (tc, thw) for one grid step's (channel, H*W) tile.

    Channel tile first (big rows kill the duplicated weight DMA of the
    Cw == 1 path and densify the (tc, 1) output stores), then the H*W tile
    from the remaining element budget.  Axes that are unaligned AND too
    large to take whole must already have been padded by the caller."""
    # Minimum spatial tile we may end up with: 128 lanes when HW is
    # lane-aligned, otherwise the whole (already-verified-small) HW.
    thw_unit = _LANE if HW % _LANE == 0 else HW

    # --- channel tile ------------------------------------------------------
    tc_cap = min(C, 256, max(sub_align, max_tile_elems // thw_unit))
    if N == 1 and C % sub_align == 0 and C >= 2 * sub_align:
        # Keep >= 2 iterations on the "parallel" grid axes so both v7x
        # TensorCores get work (no-op cost on 1-TC v5e/v6e).
        tc_cap = min(tc_cap, C // 2)
    if C % sub_align == 0:
        tc = _largest_aligned_divisor(C, sub_align, tc_cap)
    else:
        tc = C  # small / unaligned channel count: take it whole

    # --- H*W tile from the remaining budget ---------------------------------
    thw_cap = max(_LANE, max_tile_elems // tc)
    if HW % _LANE == 0 and HW > thw_cap:
        thw = _largest_aligned_divisor(HW, _LANE, thw_cap)
    else:
        thw = HW
    return tc, thw


def weighted_sum_2d(x, weights):
    """x: (N, C, H, W); weights: (N, Cw, H, W), Cw in {1, C}. Returns (N, C, 1, 1)."""
    N, C, H, W = x.shape
    Nw, Cw, Hw, Ww = weights.shape
    assert H == Hw and W == Ww, (
        "err: h, w of tensors x and weights must be the same."
    )
    assert Nw == N, "err: batch dims of x and weights must match."
    assert Cw in (1, C), "err: weights channel dim must be 1 or equal x channels."

    HW = H * W
    out_dtype = jnp.result_type(x.dtype, weights.dtype)
    ix = jnp.dtype(x.dtype).itemsize
    iw = jnp.dtype(weights.dtype).itemsize

    # Sublane alignment for the narrowest dtype involved (8 f32 / 16 bf16 / 32 i8).
    min_itemsize = min(ix, iw, jnp.dtype(out_dtype).itemsize)
    sub_align = 8 * (4 // min_itemsize)

    # ---- bytes-based, dtype-aware per-step VMEM budget ---------------------
    # Per tile element of one (tc, thw) step: 2 pipeline buffers for each
    # streamed input, plus the f32 cast/product temporaries.  The Cw == 1
    # weight row is negligible.
    f32_temp = 4                                   # the f32 product
    if x.dtype != jnp.float32:
        f32_temp += 4                              # x cast temporary
    bytes_per_elem = 2 * ix + f32_temp
    if Cw == C:
        bytes_per_elem += 2 * iw
        if weights.dtype != jnp.float32:
            bytes_per_elem += 4                    # w cast temporary

    vmem_cap = _vmem_capacity_bytes()              # 64 MiB v7x / 128 MiB v5e,v6e
    vmem_limit = min(vmem_cap * 3 // 4, 96 * _MIB)  # raised scoped-VMEM limit
    usable = vmem_limit - 4 * _MIB                 # headroom for acc/out/internal scratch
    max_tile_elems = max(sub_align * _LANE, usable // bytes_per_elem)
    # >16 MiB per x-tile DMA gives <1% extra amortisation; cap for compile sanity.
    max_tile_elems = min(max_tile_elems, 16 * _MIB // ix)

    # ---- pad misaligned axes only when taking them whole would blow VMEM ---
    pad_hw = 0
    if HW % _LANE != 0 and sub_align * HW > max_tile_elems:
        pad_hw = (-HW) % _LANE         # zero padding is exact for a weighted sum
    HW_p = HW + pad_hw
    thw_unit = _LANE if HW_p % _LANE == 0 else HW_p
    pad_c = 0
    if C % sub_align != 0 and C * thw_unit > max_tile_elems:
        pad_c = (-C) % sub_align       # padded channels are sliced off the output
    C_p = C + pad_c

    # Flatten spatial dims so the reduction axis is the lane-major last dim.
    x3 = x.reshape(N, C, HW)
    w3 = weights.reshape(N, Cw, HW)
    if pad_c or pad_hw:
        x3 = jnp.pad(x3, ((0, 0), (0, pad_c), (0, pad_hw)))
        w3 = jnp.pad(w3, ((0, 0), (0, pad_c if Cw == C else 0), (0, pad_hw)))

    tc, thw = _choose_tiles(N, C_p, HW_p, sub_align, max_tile_elems)
    grid = (N, C_p // tc, HW_p // thw)

    x_spec = pl.BlockSpec((pl.Squeezed(), tc, thw), lambda n, c, k: (n, c, k))
    if Cw == 1:
        # Re-use the single weight row for every channel tile: no materialised
        # broadcast in HBM; the VPU broadcasts the (1, thw) row in VMEM.  With
        # tc >= 64 the per-channel-tile re-fetch is <2% of total HBM traffic.
        w_spec = pl.BlockSpec((pl.Squeezed(), 1, thw), lambda n, c, k: (n, 0, k))
    else:
        w_spec = pl.BlockSpec((pl.Squeezed(), tc, thw), lambda n, c, k: (n, c, k))
    out_spec = pl.BlockSpec((pl.Squeezed(), tc, 1), lambda n, c, k: (n, c, 0))

    # NOTE: on v7x a third x buffer (pipeline_mode=pl.Buffered(3)) can hide DMA
    # issue jitter for a few %; left at the default pending a sweep since it
    # costs one extra tile of VMEM.
    out = pl.pallas_call(
        _weighted_sum_kernel,
        out_shape=jax.ShapeDtypeStruct((N, C_p, 1), out_dtype),
        grid_spec=pltpu.PrefetchScalarGridSpec(
            num_scalar_prefetch=0,
            grid=grid,
            in_specs=[x_spec, w_spec],
            out_specs=out_spec,
            scratch_shapes=[pltpu.VMEM((tc, 1), jnp.float32)],
        ),
        compiler_params=pltpu.CompilerParams(
            dimension_semantics=("parallel", "parallel", "arbitrary"),
            vmem_limit_bytes=int(vmem_limit),
        ),
    )(x3, w3)

    if pad_c:
        out = out[:, :C, :]
    return out.reshape(N, C, 1, 1)


if __name__ == "__main__":
    key = jax.random.PRNGKey(0)
    kx, kw, kw2 = jax.random.split(key, 3)

    N, C, H, W = 2, 4, 16, 16
    x = jax.random.normal(kx, (N, C, H, W), dtype=jnp.float32)
    # Weights with a singleton channel dim (typical attention-mask usage).
    weights = jax.random.normal(kw, (N, 1, H, W), dtype=jnp.float32)

    out = jax.block_until_ready(weighted_sum_2d(x, weights))
    ref = jnp.sum((x * weights).reshape(N, C, H * W), axis=2).reshape(N, C, 1, 1)
    assert out.shape == (N, C, 1, 1)
    assert jnp.allclose(out, ref, atol=1e-5, rtol=1e-5)

    # Also exercise the per-channel-weights path (Cw == C).
    w_full = jax.random.normal(kw2, (N, C, H, W), dtype=jnp.float32)
    out2 = jax.block_until_ready(weighted_sum_2d(x, w_full))
    ref2 = jnp.sum((x * w_full).reshape(N, C, H * W), axis=2).reshape(N, C, 1, 1)
    assert jnp.allclose(out2, ref2, atol=1e-5, rtol=1e-5)

    print("KERNEL_OK")
</pallas_src>

<mosaic_0001>
module attributes {stable_mosaic.version = 11 : i64} {
  func.func @_weighted_sum_kernel(%arg0: i32, %arg1: i32, %arg2: i32, %arg3: memref<1x4x256xf32, #tpu.memory_space<vmem>>, %arg4: memref<1x1x256xf32, #tpu.memory_space<vmem>>, %arg5: memref<1x4x1xf32, #tpu.memory_space<vmem>>, %arg6: memref<4x1xf32, #tpu.memory_space<vmem>>) attributes {dimension_semantics = [#tpu.dimension_semantics<parallel>, #tpu.dimension_semantics<parallel>, #tpu.dimension_semantics<arbitrary>], iteration_bounds = array<i64: 2, 1, 1>, scalar_prefetch = 0 : i64, scratch_operands = 1 : i64, tpu.core_type = #tpu.core_type<tc>, window_params = [{transform_indices = @transform_0, window_bounds = array<i64: 1, 4, 256>}, {transform_indices = @transform_1, window_bounds = array<i64: 1, 1, 256>}, {transform_indices = @transform_2, window_bounds = array<i64: 1, 4, 1>}]} {
    %c0_i32 = arith.constant 0 : i32
    %0 = arith.cmpi eq, %arg2, %c0_i32 : i32
    %1 = arith.extui %0 : i1 to i32
    %c0_i32_0 = arith.constant 0 : i32
    %2 = arith.cmpi ne, %1, %c0_i32_0 : i32
    scf.if %2 {
      %cst_12 = arith.constant 0.000000e+00 : f32
      %17 = vector.broadcast %cst_12 : f32 to vector<4x1xf32>
      %c0_13 = arith.constant 0 : index
      %c0_14 = arith.constant 0 : index
      %18 = vector.load %arg6[%c0_13, %c0_14] : memref<4x1xf32, #tpu.memory_space<vmem>>, vector<4x1xf32>
      tpu.vector_store %arg6[%c0_13, %c0_14], %17 {strides = array<i32>} : memref<4x1xf32, #tpu.memory_space<vmem>>, vector<4x1xf32>,
    } else {
    }
    %c0 = arith.constant 0 : index
    %c0_1 = arith.constant 0 : index
    %c0_2 = arith.constant 0 : index
    %3 = vector.load %arg3[%c0, %c0_1, %c0_2] : memref<1x4x256xf32, #tpu.memory_space<vmem>>, vector<1x4x256xf32>
    %4 = vector.shape_cast %3 : vector<1x4x256xf32> to vector<4x256xf32>
    %c0_3 = arith.constant 0 : index
    %c0_4 = arith.constant 0 : index
    %c0_5 = arith.constant 0 : index
    %5 = vector.load %arg4[%c0_3, %c0_4, %c0_5] : memref<1x1x256xf32, #tpu.memory_space<vmem>>, vector<1x1x256xf32>
    %6 = vector.shape_cast %5 : vector<1x1x256xf32> to vector<1x256xf32>
    %7 = vector.broadcast %6 : vector<1x256xf32> to vector<4x256xf32>
    %8 = arith.mulf %4, %7 : vector<4x256xf32>
    %c0_6 = arith.constant 0 : index
    %c0_7 = arith.constant 0 : index
    %9 = vector.load %arg6[%c0_6, %c0_7] : memref<4x1xf32, #tpu.memory_space<vmem>>, vector<4x1xf32>
    %cst = arith.constant dense<0.000000e+00> : vector<4xf32>
    %10 = vector.multi_reduction <add>, %8, %cst [1] : vector<4x256xf32> to vector<4xf32>
    %11 = vector.shape_cast %10 : vector<4xf32> to vector<4x1xf32>
    %12 = arith.addf %9, %11 : vector<4x1xf32>
    %c0_8 = arith.constant 0 : index
    %c0_9 = arith.constant 0 : index
    %13 = vector.load %arg6[%c0_8, %c0_9] : memref<4x1xf32, #tpu.memory_space<vmem>>, vector<4x1xf32>
    tpu.vector_store %arg6[%c0_8, %c0_9], %12 {strides = array<i32>} : memref<4x1xf32, #tpu.memory_space<vmem>>, vector<4x1xf32>,
    %c0_i32_10 = arith.constant 0 : i32
    %14 = arith.cmpi eq, %arg2, %c0_i32_10 : i32
    %15 = arith.extui %14 : i1 to i32
    %c0_i32_11 = arith.constant 0 : i32
    %16 = arith.cmpi ne, %15, %c0_i32_11 : i32
    scf.if %16 {
      %c0_12 = arith.constant 0 : index
      %c0_13 = arith.constant 0 : index
      %17 = vector.load %arg6[%c0_12, %c0_13] : memref<4x1xf32, #tpu.memory_space<vmem>>, vector<4x1xf32>
      %c0_14 = arith.constant 0 : index
      %c0_15 = arith.constant 0 : index
      %c0_16 = arith.constant 0 : index
      %18 = vector.load %arg5[%c0_14, %c0_15, %c0_16] : memref<1x4x1xf32, #tpu.memory_space<vmem>>, vector<1x4x1xf32>
      %19 = vector.shape_cast %18 : vector<1x4x1xf32> to vector<4x1xf32>
      %20 = vector.shape_cast %17 : vector<4x1xf32> to vector<1x4x1xf32>
      tpu.vector_store %arg5[%c0_14, %c0_15, %c0_16], %20 {strides = array<i32>} : memref<1x4x1xf32, #tpu.memory_space<vmem>>, vector<1x4x1xf32>,
    } else {
    }
    return
  }
  func.func @transform_0(%arg0: i32, %arg1: i32, %arg2: i32) -> (i32, i32, i32) {
    %c0_i32 = arith.constant 0 : i32
    return %arg0, %arg1, %arg2 : i32, i32, i32
  }
  func.func @transform_1(%arg0: i32, %arg1: i32, %arg2: i32) -> (i32, i32, i32) {
    %c0_i32 = arith.constant 0 : i32
    %c0_i32_0 = arith.constant 0 : i32
    return %arg0, %c0_i32, %arg2 : i32, i32, i32
  }
  func.func @transform_2(%arg0: i32, %arg1: i32, %arg2: i32) -> (i32, i32, i32) {
    %c0_i32 = arith.constant 0 : i32
    %c0_i32_0 = arith.constant 0 : i32
    return %arg0, %arg1, %c0_i32 : i32, i32, i32
  }
}

</mosaic_0001>

<llo_original>
// kernel: tpu_custom_call.1
$region0: #{tpu_custom_call.1}
  #allocation0 [shape = 'u32[]', space=smem, size = 0x4, offset = 0x4, fixed_abs, tag = 'smem constant byte address 0x4 - core index']
  #allocation1 [shape = 'u32[144,128]{1,0:T(1,128)}', space=vmem, size = 0x12000, scoped, tag = 'internal scratch']
  #allocation2 [shape = 'f32[4,1]{1,0:T(4,128)}', space=vmem, size = 0x800, scoped, tag = 'scratch operand']
  %s0 = inlined_call_operand.hbm [shape: f32[2,4,256], index: 0, kind: input, shape index: {}]
  %s1 = inlined_call_operand.hbm [shape: f32[2,1,256], index: 1, kind: input, shape index: {}]
  %s2 = inlined_call_operand.vmem [shape: f32[2,4,1], index: 2, kind: output, shape index: {}]
  %s3 = sld [smem:[#allocation0]]
  $region57: #{tpu_custom_call.1} parent=0
    _
  %s5 = ssub.s32 1, %s3
  %s6 = scalar_select 0, %s5, %s3
  $region1: #{tpu_custom_call.1} parent=0
    #allocation3 [shape = 'u8[8192]{0}', space=vmem, size = 0x2000, scoped, tag = 'input window, operand 0']
    #allocation4 [shape = 's32[2]{0}', space=sflag, size = 0x8, scoped, tag = 'scoped memory for tpu_custom_call.1']
    #allocation5 [shape = 'u8[2048]{0}', space=vmem, size = 0x800, scoped, tag = 'input window, operand 1']
    #allocation6 [shape = 's32[2]{0}', space=sflag, size = 0x8, scoped, tag = 'scoped memory for tpu_custom_call.1']
    %7 = vsyncpa [#allocation4], 0
    %s8 = scalar_lea.sflag [#allocation4], 1
    %9 = vsyncpa %s8, 0
    %10 = vsyncpa [#allocation6], 0
    %s11 = scalar_lea.sflag [#allocation6], 1
    %12 = vsyncpa %s11, 0
    loop: start=0, step=1, limit=4
    $region2: #{tpu_custom_call.1} parent=1 // loop_pre_header
      _
    $region3: #{tpu_custom_call.1} parent=1 // loop_header
      %s14 = sphi 0, %s18
      %p15 = scmp.ge.s32.totalorder %s14, 4
      %s21 = sphi 0, %s40
      %s22 = sphi 0, %s36
      %s23 = sphi 0, %s32
      %s24 = sphi 0, %s21
      %s25 = sphi 0, %s22
      %s26 = sphi 0, %s23
      %s27 = sphi 0, %s24
      %s28 = sphi 0, %s25
      %s29 = sphi 0, %s26
      %s47 = sphi 0, %s49
      %s50 = sphi 0, %s47
      %s51 = sphi 0, %s50
      %s67 = sphi 0, %s51
      %s75 = sphi 0, %s77
      %s78 = sphi 0, %s75
      %s79 = sphi 0, %s78
      %s95 = sphi 0, %s79
      %s103 = sphi 0, %s105
      %s106 = sphi 0, %s103
      %s107 = sphi 0, %s106
      %s123 = sphi 0, %s107
    $region4: #{tpu_custom_call.1} parent=1 // loop_header_branch
      %17 = sbr.rel (%p15) target = $region8
    $region5: #{tpu_custom_call.1} parent=1 // loop_body
      %s19 = ssub.s32 %s14, 1
      %s20 = ssub.s32 %s14, 2
      %s30 = sadd.s32 1, %s23
      %p31 = scmp.ge.s32.totalorder %s30, 1
      %s32 = scalar_select %p31, 0, %s30
      %s33 = sadd.s32 1, %s22
      %s34 = scalar_select %p31, %s33, %s22
      %p35 = scmp.ge.s32.totalorder %s34, 1
      %s36 = scalar_select %p35, 0, %s34
      %s37 = sadd.s32 1, %s21
      %s38 = scalar_select %p35, %s37, %s21
      %p39 = scmp.ge.s32.totalorder %s38, 2
      %s40 = scalar_select %p39, 0, %s38
      %s41 = ssub.s32 %s21, %s40
      %s42 = ssub.s32 %s22, %s36
      %s43 = sor.u32 %s41, %s42
      %s44 = ssub.s32 %s23, %s32
      %s45 = sor.u32 %s43, %s44
      %p46 = scmp.eq.s32.totalorder %s45, 0
      %s48 = sadd.s32 %s47, 1
      %s49 = scalar_select %p46, %s47, %s48
      %p52 = pneg %p46
      %p53 = scmp.eq.s32.totalorder %s14, 1
      %p54 = por %p52, %p53
      %p55 = scmp.ne.s32.totalorder %s47, %s50
      %p56 = scmp.eq.s32.totalorder %s14, 0
      %p57 = por %p55, %p56
      %p58 = scmp.ne.s32.totalorder %s47, %s50
      %p59 = scmp.eq.s32.totalorder %s19, 1
      %p60 = por %p58, %p59
      %p61 = scmp.ne.s32.totalorder %s50, %s51
      %p62 = scmp.eq.s32.totalorder %s19, 0
      %p63 = por %p61, %p62
      %p64 = scmp.ne.s32.totalorder %s50, %s51
      %p65 = scmp.eq.s32.totalorder %s20, 1
      %p66 = por %p64, %p65
      %p68 = scmp.ne.s32.totalorder %s51, %s67
      %p69 = scmp.eq.s32.totalorder %s20, 0
      %p70 = por %p68, %p69
      %s71 = ssub.s32 %s21, %s40
      %s72 = ssub.s32 %s23, %s32
      %s73 = sor.u32 %s71, %s72
      %p74 = scmp.eq.s32.totalorder %s73, 0
      %s76 = sadd.s32 %s75, 1
      %s77 = scalar_select %p74, %s75, %s76
      %p80 = pneg %p74
      %p81 = scmp.eq.s32.totalorder %s14, 1
      %p82 = por %p80, %p81
      %p83 = scmp.ne.s32.totalorder %s75, %s78
      %p84 = scmp.eq.s32.totalorder %s14, 0
      %p85 = por %p83, %p84
      %p86 = scmp.ne.s32.totalorder %s75, %s78
      %p87 = scmp.eq.s32.totalorder %s19, 1
      %p88 = por %p86, %p87
      %p89 = scmp.ne.s32.totalorder %s78, %s79
      %p90 = scmp.eq.s32.totalorder %s19, 0
      %p91 = por %p89, %p90
      %p92 = scmp.ne.s32.totalorder %s78, %s79
      %p93 = scmp.eq.s32.totalorder %s20, 1
      %p94 = por %p92, %p93
      %p96 = scmp.ne.s32.totalorder %s79, %s95
      %p97 = scmp.eq.s32.totalorder %s20, 0
      %p98 = por %p96, %p97
      %s99 = ssub.s32 %s21, %s40
      %s100 = ssub.s32 %s22, %s36
      %s101 = sor.u32 %s99, %s100
      %p102 = scmp.eq.s32.totalorder %s101, 0
      %s104 = sadd.s32 %s103, 1
      %s105 = scalar_select %p102, %s103, %s104
      %p108 = pneg %p102
      %p109 = scmp.eq.s32.totalorder %s14, 1
      %p110 = por %p108, %p109
      %p111 = scmp.ne.s32.totalorder %s103, %s106
      %p112 = scmp.eq.s32.totalorder %s14, 0
      %p113 = por %p111, %p112
      %p114 = scmp.ne.s32.totalorder %s103, %s106
      %p115 = scmp.eq.s32.totalorder %s19, 1
      %p116 = por %p114, %p115
      %p117 = scmp.ne.s32.totalorder %s106, %s107
      %p118 = scmp.eq.s32.totalorder %s19, 0
      %p119 = por %p117, %p118
      %p120 = scmp.ne.s32.totalorder %s106, %s107
      %p121 = scmp.eq.s32.totalorder %s20, 1
      %p122 = por %p120, %p121
      %p124 = scmp.ne.s32.totalorder %s107, %s123
      %p125 = scmp.eq.s32.totalorder %s20, 0
      %p126 = por %p124, %p125
      %p127 = scmp.le.s32.totalorder 1, %s14
      %p128 = scmp.lt.s32.totalorder %s14, 3
      %p129 = pnand %p127, %p128
      %p130 = pneg %p129
      // Predicated region
      $region9: #{tpu_custom_call.1} parent=5 // pred_check
        _
      $region10: #{tpu_custom_call.1} parent=5 // pred_check_branch
        %132 = sbr.rel (%p129) target = $region12
      $region11: #{tpu_custom_call.1} parent=5 // pred_region
        %s133 = ssub.s32 %s14, 1
      $region12: #{tpu_custom_call.1} parent=5 // pred_fallthru
        _
      %p134 = scmp.lt.s32.totalorder %s14, 2
      // Predicated region
      $region13: #{tpu_custom_call.1} parent=5 // pred_check
        %p135 = pneg %p134
      $region14: #{tpu_custom_call.1} parent=5 // pred_check_branch
        %137 = sbr.rel (%p135) target = $region16
      $region15: #{tpu_custom_call.1} parent=5 // pred_region
        // Predicated region
        $region17: #{tpu_custom_call.1} parent=15 // pred_check
          %p138 = pneg %p57
        $region18: #{tpu_custom_call.1} parent=15 // pred_check_branch
          %140 = sbr.rel (%p138) target = $region20
        $region19: #{tpu_custom_call.1} parent=15 // pred_region
          %s141 = sand.u32 %s47, 1
          %s142 = scalar_lea.sflag [#allocation4], %s141
          %s143 = sand.u32 %s47, 1
          %s144 = smul.addr %s143, 8
          %s145 = scalar_lea.vmem [#allocation3], %s144
          %s146 = smul.u32 2, %s23
          %s148 = ssub.s32 128, 128
          %149 = vsyncadd %s142, %s148
          %s150 = smul.addr %s22, 2
          %s151 = sadd.s32 %s146, %s150
          %s152 = smul.addr %s21, 2
          %s153 = sadd.s32 %s151, %s152
          %s154 = smul.addr %s153, 64
          %s155 = scalar_lea.hbm %s0, %s154
          %s157 = sshll.u32 %s145, 4
          %s158 = int_to_ptr.vmem [resolvable:$true] %s157
          %160 = dma.hbm_to_vmem [thread:$0]  %s155, 128, %s158, %s142
        $region20: #{tpu_custom_call.1} parent=15 // pred_fallthru
          _
        // Predicated region
        $region21: #{tpu_custom_call.1} parent=15 // pred_check
          %p161 = pneg %p85
        $region22: #{tpu_custom_call.1} parent=15 // pred_check_branch
          %163 = sbr.rel (%p161) target = $region24
        $region23: #{tpu_custom_call.1} parent=15 // pred_region
          %s164 = sand.u32 %s75, 1
          %s165 = scalar_lea.sflag [#allocation6], %s164
          %s166 = sand.u32 %s75, 1
          %s167 = smul.addr %s166, 2
          %s168 = scalar_lea.vmem [#allocation5], %s167
          %s169 = smul.u32 2, %s23
          %s171 = ssub.s32 32, 32
          %172 = vsyncadd %s165, %s171
          %s173 = smul.addr %s21, 2
          %s174 = sadd.s32 %s169, %s173
          %s175 = smul.addr %s174, 16
          %s176 = scalar_lea.hbm %s1, %s175
          %s178 = sshll.u32 %s168, 4
          %s179 = int_to_ptr.vmem [resolvable:$true] %s178
          %181 = dma.hbm_to_vmem [thread:$0]  %s176, 32, %s179, %s165
        $region24: #{tpu_custom_call.1} parent=15 // pred_fallthru
          _
      $region16: #{tpu_custom_call.1} parent=5 // pred_fallthru
        _
      %p182 = scmp.le.s32.totalorder 1, %s14
      %p183 = scmp.lt.s32.totalorder %s14, 3
      %p184 = pnand %p182, %p183
      %p185 = pneg %p184
      // Predicated region
      $region25: #{tpu_custom_call.1} parent=5 // pred_check
        _
      $region26: #{tpu_custom_call.1} parent=5 // pred_check_branch
        %187 = sbr.rel (%p184) target = $region28
      $region27: #{tpu_custom_call.1} parent=5 // pred_region
        %s188 = ssub.s32 %s14, 1
        %s189 = sand.u32 %s50, 1
        %s190 = scalar_lea.sflag [#allocation4], %s189
        %s191 = sand.u32 %s50, 1
        %s192 = smul.addr %s191, 8
        %s193 = scalar_lea.vmem [#allocation3], %s192
        // Predicated region
        $region29: #{tpu_custom_call.1} parent=27 // pred_check
          %p194 = pneg %p63
        $region30: #{tpu_custom_call.1} parent=27 // pred_check_branch
          %196 = sbr.rel (%p194) target = $region32
        $region31: #{tpu_custom_call.1} parent=27 // pred_region
          %197 = dma.done %s190, 128
        $region32: #{tpu_custom_call.1} parent=27 // pred_fallthru
          _
        %s198 = sand.u32 %s78, 1
        %s199 = scalar_lea.sflag [#allocation6], %s198
        %s200 = sand.u32 %s78, 1
        %s201 = smul.addr %s200, 2
        %s202 = scalar_lea.vmem [#allocation5], %s201
        // Predicated region
        $region33: #{tpu_custom_call.1} parent=27 // pred_check
          %p203 = pneg %p91
        $region34: #{tpu_custom_call.1} parent=27 // pred_check_branch
          %205 = sbr.rel (%p203) target = $region36
        $region35: #{tpu_custom_call.1} parent=27 // pred_region
          %206 = dma.done %s199, 32
        $region36: #{tpu_custom_call.1} parent=27 // pred_fallthru
          _
        %s207 = sand.u32 %s50, 1
        %s208 = scalar_lea.sflag [#allocation4], %s207
        %s209 = sand.u32 %s50, 1
        %s210 = smul.addr %s209, 8
        %s211 = scalar_lea.vmem [#allocation3], %s210
        %p212 = pneg %p63
        %p213 = pneg %p60
        %s214 = sand.u32 %s78, 1
        %s215 = scalar_lea.sflag [#allocation6], %s214
        %s216 = sand.u32 %s78, 1
        %s217 = smul.addr %s216, 2
        %s218 = scalar_lea.vmem [#allocation5], %s217
        %p219 = pneg %p91
        %p220 = pneg %p88
        %p221 = pneg %p119
        %p222 = pneg %p116
        %p223 = scmp.lt.s32.totalorder %s24, 1
        %s224 = scalar_select %p223, %s24, 1
        %p225 = scmp.lt.s32.totalorder %s25, 0
        %s226 = scalar_select %p225, %s25, 0
        %s227 = sadd.s32 %s226, %s224
        %s228 = smul.addr %s227, 4
        %s229 = scalar_lea.vmem %s2, %s228
        %s230 = smul.u32 2, %s26
        %s231 = smul.u32 2, %s26
        %p232 = scmp.lt.s32.totalorder %s24, 1
        %s233 = scalar_select %p232, %s24, 1
        %p234 = scmp.lt.s32.totalorder %s25, 0
        %s235 = scalar_select %p234, %s25, 0
        %s236 = sadd.s32 %s235, %s233
        %s237 = smul.addr %s236, 4
        %s238 = scalar_lea.vmem %s2, %s237
        %p239 = scmp.eq.s32.totalorder %s26, 0
        // Predicated region
        $region37: #{tpu_custom_call.1} parent=27 // pred_check
          %p240 = pneg %p239
        $region38: #{tpu_custom_call.1} parent=27 // pred_check_branch
          %242 = sbr.rel (%p240) target = $region40
        $region39: #{tpu_custom_call.1} parent=27 // pred_region
          %vm243 = vcmask 3072
          %244 = vst.msk [vmem:[#allocation2] sm:$0xf] %vm243, 0.0
        $region40: #{tpu_custom_call.1} parent=27 // pred_fallthru
          _
        %v245 = vld [vmem:[%s193] sm:$0xff]
        %v246 = vld [vmem:[%s202] sm:$0x3]
        %v248 = vlaneseq
        %v249 = vshrl.u32 %v248, 7
        %v250 = vsub.s32 0, %v249
        %v251 = vrot.slane %v246, %v250
        %v252 = vlaneseq
        %v253 = vshrl.u32 %v252, 7
        %v254 = vsub.s32 1, %v253
        %v255 = vrot.slane %v246, %v254
        %v256 = vcombine.low %v251, %v255
        %v258 = vmul.f32 %v245, %v256
        %v259 = vld [vmem:[#allocation2] sm:$0xf]
        %v261 = vcombine.high %v258, %v258
        %vm263 = vcmask 1043456
        %v264 = vsel %vm263, %v258, 0.0
        %v265 = vsel %vm263, %v261, 0.0
        %v266 = vadd.f32 %v264, %v265
        %267 = vadd.xlane.f32.xlu0 %v266
        %v268 = vpop.xlane.xlu0 %267
        %v269 = vadd.f32 %v259, %v268
        %vm270 = vcmask 3072
        %271 = vst.msk [vmem:[#allocation2] sm:$0xf] %vm270, %v269
        // Predicated region
        $region41: #{tpu_custom_call.1} parent=27 // pred_check
          %p272 = pneg %p239
        $region42: #{tpu_custom_call.1} parent=27 // pred_check_branch
          %274 = sbr.rel (%p272) target = $region44
        $region43: #{tpu_custom_call.1} parent=27 // pred_region
          %v275 = vld [vmem:[#allocation2] sm:$0xf]
          %276 = vst.msk [vmem:[%s238] sm:$0xf] %vm270, %v275
        $region44: #{tpu_custom_call.1} parent=27 // pred_fallthru
          _
        %p277 = scmp.lt.s32.totalorder %s24, 1
        %s278 = scalar_select %p277, %s24, 1
        %p279 = scmp.lt.s32.totalorder %s25, 0
        %s280 = scalar_select %p279, %s25, 0
        %s281 = sadd.s32 %s280, %s278
        %s282 = smul.addr %s281, 4
        %s283 = scalar_lea.vmem %s2, %s282
        // Predicated region
        $region45: #{tpu_custom_call.1} parent=27 // pred_check
          %p284 = pneg %p116
        $region46: #{tpu_custom_call.1} parent=27 // pred_check_branch
          %286 = sbr.rel (%p284) target = $region48
        $region47: #{tpu_custom_call.1} parent=27 // pred_region
          _
        $region48: #{tpu_custom_call.1} parent=27 // pred_fallthru
          _
      $region28: #{tpu_custom_call.1} parent=5 // pred_fallthru
        _
      %p287 = scmp.le.s32.totalorder 2, %s14
      // Predicated region
      $region49: #{tpu_custom_call.1} parent=5 // pred_check
        %p288 = pneg %p287
      $region50: #{tpu_custom_call.1} parent=5 // pred_check_branch
        %290 = sbr.rel (%p288) target = $region52
      $region51: #{tpu_custom_call.1} parent=5 // pred_region
        %s291 = ssub.s32 %s14, 2
        // Predicated region
        $region53: #{tpu_custom_call.1} parent=51 // pred_check
          %p292 = pneg %p122
        $region54: #{tpu_custom_call.1} parent=51 // pred_check_branch
          %294 = sbr.rel (%p292) target = $region56
        $region55: #{tpu_custom_call.1} parent=51 // pred_region
          %p295 = scmp.lt.s32.totalorder %s27, 1
          %s296 = scalar_select %p295, %s27, 1
          %p297 = scmp.lt.s32.totalorder %s28, 0
          %s298 = scalar_select %p297, %s28, 0
          %s299 = sadd.s32 %s298, %s296
          %s300 = smul.addr %s299, 4
          %s301 = scalar_lea.vmem %s2, %s300
        $region56: #{tpu_custom_call.1} parent=51 // pred_fallthru
          _
      $region52: #{tpu_custom_call.1} parent=5 // pred_fallthru
        _
    $region6: #{tpu_custom_call.1} parent=1 // loop_footer
      %s18 = sadd.s32 1, %s14
    $region7: #{tpu_custom_call.1} parent=1 // loop_footer_branch
      %13 = sbr.rel target = $region3
    $region8: #{tpu_custom_call.1} parent=1 // loop_exit
      _
    %302 = vsyncpa [#allocation4], 1
    %s303 = scalar_lea.sflag [#allocation4], 1
    %304 = vsyncpa %s303, 1
    %305 = vsyncpa [#allocation6], 1
    %s306 = scalar_lea.sflag [#allocation6], 1
    %307 = vsyncpa %s306, 1

</llo_original>
